<compile_context>
chip_gen: v7x
topology: tpu7x:2x2x1
jax: 0.10.0
libtpu: 0.0.40
codegen_flags: <defaults>
</compile_context>

<pallas_src>
import jax
import jax.numpy as jnp
import numpy as np
from jax import lax
from jax.experimental import pallas as pl
from jax.experimental.pallas import tpu as pltpu


def attn_kernel(h_ref, enc_ref, wt_ref, b_ref, v_ref, pbt_ref, pb_ref, ps_ref, out_ref):
    """Single invocation over the whole (B, S) problem.

    h_ref   : [B, H]     hidden[-1]
    enc_ref : [N, 2H]    encoder outputs, natural s-major rows: n = s*B + b
    wt_ref  : [3H, H]    Linear weight, transposed (rows 0:H hidden part, H: enc part)
    b_ref   : [1, H]     Linear bias
    v_ref   : [1, H]     scoring vector
    pbt_ref : [N, B]     0/1 selector, pbt[n, b] = (n % B == b)   (trace-time constant)
    pb_ref  : [B, N]     0/1 selector, pb[b, n]  = (n % B == b)   (trace-time constant)
    ps_ref  : [N, S]     0/1 selector, ps[n, s]  = (n // B == s)  (trace-time constant)
    out_ref : [B, S]     softmax(scores) with S on lanes
    """
    f32 = jnp.float32
    B, H = h_ref.shape

    # Split the transposed Linear weight (static ref slices, zero-cost views -> loads).
    wh_t = wt_ref[:H, :]          # [H, H]   hidden part
    we_t = wt_ref[H:, :]          # [2H, H]  encoder part

    # Encoder projection for the whole (S*B) slab in ONE MXU matmul: [N, 2H] @ [2H, H].
    eproj = jnp.dot(enc_ref[...], we_t, preferred_element_type=f32)              # [N, H]

    # Hidden projection + bias, computed once: [B, H] @ [H, H] + [1, H].
    hpre = jnp.dot(h_ref[...], wh_t, preferred_element_type=f32) + b_ref[...]    # [B, H]

    # Broadcast each batch's row over its S positions (rows are n = s*B + b) on the MXU
    # with the trace-time 0/1 selector: [N, B] @ [B, H] -> [N, H].
    hslab = jnp.dot(pbt_ref[...], hpre, preferred_element_type=f32)              # [N, H]

    energy = jnp.tanh(eproj + hslab)                                             # [N, H]

    # v-reduction: weight by v (VPU) and lane-reduce per (s, b) row (XLU): [N, 1].
    sv = jnp.sum(energy * v_ref[...], axis=-1, keepdims=True)                    # [N, 1]

    # Un-interleave the s-major score column into a [B, S] tile (S on lanes) with one
    # broadcast-multiply + one matmul:  scores[b, s] = sum_n pb[b, n] * sv[n] * ps[n, s].
    scores = jnp.dot(pb_ref[...], sv * ps_ref[...], preferred_element_type=f32)  # [B, S]

    # Row softmax over the S lanes: per-segment max/sum are plain lane reduces.
    m = jnp.max(scores, axis=-1, keepdims=True)                                  # [B, 1]
    p = jnp.exp(scores - m)                                                      # [B, S]
    d = jnp.sum(p, axis=-1, keepdims=True)                                       # [B, 1]
    r = pl.reciprocal(d, approx=True)                                            # EUP vrcp
    r = r * (2.0 - d * r)                                                        # one Newton-Raphson step
    out_ref[...] = p * r


@jax.jit
def attention_forward(hidden, encoder_outputs, weight, bias, v):
    """hidden: [L,B,H], encoder_outputs: [S,B,2H], weight: [H,3H], bias: [H], v: [H] -> [B,S]"""
    L, B, H = hidden.shape
    S = encoder_outputs.shape[0]
    N = S * B

    h_last = hidden[-1]                              # [B, H]    free view
    enc2d = encoder_outputs.reshape(N, 2 * H)        # [N, 2H]   free view, row n = s*B + b
    w_t = weight.T                                   # [3H, H]   tiny
    b_row = bias.reshape(1, H)                       # [1, H]
    v_row = v.reshape(1, H)                          # [1, H]

    # 0/1 selector constants, built once at trace time (depend only on B, S).
    n_idx = np.arange(N)
    pb_np = ((n_idx[None, :] % B) == np.arange(B)[:, None]).astype(np.float32)    # [B, N]
    ps_np = ((n_idx[:, None] // B) == np.arange(S)[None, :]).astype(np.float32)   # [N, S]
    pbt = jnp.asarray(np.ascontiguousarray(pb_np.T))                              # [N, B]
    pb = jnp.asarray(pb_np)                                                       # [B, N]
    ps = jnp.asarray(ps_np)                                                       # [N, S]

    vmem = pltpu.MemorySpace.VMEM
    out = pl.pallas_call(
        attn_kernel,
        out_shape=jax.ShapeDtypeStruct((B, S), jnp.float32),
        in_specs=[pl.BlockSpec(memory_space=vmem) for _ in range(8)],
        out_specs=pl.BlockSpec(memory_space=vmem),
    )(h_last, enc2d, w_t, b_row, v_row, pbt, pb, ps)
    return out


def attention_ref(hidden, encoder_outputs, weight, bias, v):
    """Pure-JAX reference matching the PyTorch forward exactly."""
    S = encoder_outputs.shape[0]
    h = jnp.repeat(hidden[-1][:, None, :], S, axis=1)    # [B, S, H]
    enc = jnp.transpose(encoder_outputs, (1, 0, 2))      # [B, S, 2H]
    x = jnp.concatenate([h, enc], axis=2)                # [B, S, 3H]
    energy = jnp.tanh(
        jnp.einsum("bsk,hk->bsh", x, weight, precision=lax.Precision.HIGHEST) + bias
    )                                                    # [B, S, H]
    scores = jnp.sum(v * energy, axis=2)                 # [B, S]
    return jax.nn.softmax(scores, axis=1)


if __name__ == "__main__":
    H = 32      # hidden_dim
    B = 4       # batch
    S = 8       # encoder sequence length
    L = 2       # decoder RNN layers

    key = jax.random.PRNGKey(0)
    k1, k2, k3, k4, k5 = jax.random.split(key, 5)

    # Deterministic parameter init (nn.Linear(3H, H) + nn.Parameter(rand(H)))
    bound = 1.0 / np.sqrt(3 * H)
    weight = jax.random.uniform(k1, (H, 3 * H), minval=-bound, maxval=bound, dtype=jnp.float32)
    bias = jax.random.uniform(k2, (H,), minval=-bound, maxval=bound, dtype=jnp.float32)
    v = jax.random.uniform(k3, (H,), dtype=jnp.float32)

    hidden = jax.random.normal(k4, (L, B, H), dtype=jnp.float32)
    encoder_outputs = jax.random.normal(k5, (S, B, 2 * H), dtype=jnp.float32)

    out = attention_forward(hidden, encoder_outputs, weight, bias, v)
    out = jax.block_until_ready(out)

    ref = attention_ref(hidden, encoder_outputs, weight, bias, v)
    np.testing.assert_allclose(np.asarray(out), np.asarray(ref), rtol=1e-5, atol=1e-5)
    assert out.shape == (B, S)

    print("KERNEL_OK")
</pallas_src>

<mosaic_0001>
module attributes {stable_mosaic.version = 11 : i64} {
  func.func @attn_kernel(%arg0: memref<4x32xf32, #tpu.memory_space<vmem>>, %arg1: memref<32x64xf32, #tpu.memory_space<vmem>>, %arg2: memref<96x32xf32, #tpu.memory_space<vmem>>, %arg3: memref<1x32xf32, #tpu.memory_space<vmem>>, %arg4: memref<1x32xf32, #tpu.memory_space<vmem>>, %arg5: memref<32x4xf32, #tpu.memory_space<vmem>>, %arg6: memref<4x32xf32, #tpu.memory_space<vmem>>, %arg7: memref<32x8xf32, #tpu.memory_space<vmem>>, %arg8: memref<4x8xf32, #tpu.memory_space<vmem>>) attributes {dimension_semantics = [], scalar_prefetch = 0 : i64, scratch_operands = 0 : i64, tpu.core_type = #tpu.core_type<tc>} {
    %c0 = arith.constant 0 : index
    %c0_0 = arith.constant 0 : index
    %0 = vector.load %arg2[%c0, %c0_0] : memref<96x32xf32, #tpu.memory_space<vmem>>, vector<32x32xf32>
    %c32 = arith.constant 32 : index
    %c0_1 = arith.constant 0 : index
    %1 = vector.load %arg2[%c32, %c0_1] : memref<96x32xf32, #tpu.memory_space<vmem>>, vector<64x32xf32>
    %c0_2 = arith.constant 0 : index
    %c0_3 = arith.constant 0 : index
    %2 = vector.load %arg1[%c0_2, %c0_3] : memref<32x64xf32, #tpu.memory_space<vmem>>, vector<32x64xf32>
    %cst = arith.constant dense<0.000000e+00> : vector<32x32xf32>
    %3 = tpu.matmul %2, %1, %cst {dimension_numbers = #tpu.dot_dimension_numbers<[1], [0], [0], [1], [0, 0, 1, 1], [], []>} : vector<32x64xf32>, vector<64x32xf32>, vector<32x32xf32> -> vector<32x32xf32>
    %c0_4 = arith.constant 0 : index
    %c0_5 = arith.constant 0 : index
    %4 = vector.load %arg0[%c0_4, %c0_5] : memref<4x32xf32, #tpu.memory_space<vmem>>, vector<4x32xf32>
    %cst_6 = arith.constant dense<0.000000e+00> : vector<4x32xf32>
    %5 = tpu.matmul %4, %0, %cst_6 {dimension_numbers = #tpu.dot_dimension_numbers<[1], [0], [0], [1], [0, 0, 1, 1], [], []>} : vector<4x32xf32>, vector<32x32xf32>, vector<4x32xf32> -> vector<4x32xf32>
    %c0_7 = arith.constant 0 : index
    %c0_8 = arith.constant 0 : index
    %6 = vector.load %arg3[%c0_7, %c0_8] : memref<1x32xf32, #tpu.memory_space<vmem>>, vector<1x32xf32>
    %7 = vector.broadcast %6 : vector<1x32xf32> to vector<4x32xf32>
    %8 = arith.addf %5, %7 : vector<4x32xf32>
    %c0_9 = arith.constant 0 : index
    %c0_10 = arith.constant 0 : index
    %9 = vector.load %arg5[%c0_9, %c0_10] : memref<32x4xf32, #tpu.memory_space<vmem>>, vector<32x4xf32>
    %cst_11 = arith.constant dense<0.000000e+00> : vector<32x32xf32>
    %10 = tpu.matmul %9, %8, %cst_11 {dimension_numbers = #tpu.dot_dimension_numbers<[1], [0], [0], [1], [0, 0, 1, 1], [], []>} : vector<32x4xf32>, vector<4x32xf32>, vector<32x32xf32> -> vector<32x32xf32>
    %11 = arith.addf %3, %10 : vector<32x32xf32>
    %12 = math.tanh %11 : vector<32x32xf32>
    %c0_12 = arith.constant 0 : index
    %c0_13 = arith.constant 0 : index
    %13 = vector.load %arg4[%c0_12, %c0_13] : memref<1x32xf32, #tpu.memory_space<vmem>>, vector<1x32xf32>
    %14 = vector.broadcast %13 : vector<1x32xf32> to vector<32x32xf32>
    %15 = arith.mulf %12, %14 : vector<32x32xf32>
    %cst_14 = arith.constant dense<0.000000e+00> : vector<32xf32>
    %16 = vector.multi_reduction <add>, %15, %cst_14 [1] : vector<32x32xf32> to vector<32xf32>
    %17 = vector.shape_cast %16 : vector<32xf32> to vector<32x1xf32>
    %c0_15 = arith.constant 0 : index
    %c0_16 = arith.constant 0 : index
    %18 = vector.load %arg6[%c0_15, %c0_16] : memref<4x32xf32, #tpu.memory_space<vmem>>, vector<4x32xf32>
    %c0_17 = arith.constant 0 : index
    %c0_18 = arith.constant 0 : index
    %19 = vector.load %arg7[%c0_17, %c0_18] : memref<32x8xf32, #tpu.memory_space<vmem>>, vector<32x8xf32>
    %20 = vector.broadcast %17 : vector<32x1xf32> to vector<32x8xf32>
    %21 = arith.mulf %20, %19 : vector<32x8xf32>
    %cst_19 = arith.constant dense<0.000000e+00> : vector<4x8xf32>
    %22 = tpu.matmul %18, %21, %cst_19 {dimension_numbers = #tpu.dot_dimension_numbers<[1], [0], [0], [1], [0, 0, 1, 1], [], []>} : vector<4x32xf32>, vector<32x8xf32>, vector<4x8xf32> -> vector<4x8xf32>
    %cst_20 = arith.constant dense<0xFF800000> : vector<4xf32>
    %23 = vector.multi_reduction <maximumf>, %22, %cst_20 [1] : vector<4x8xf32> to vector<4xf32>
    %24 = vector.shape_cast %23 : vector<4xf32> to vector<4x1xf32>
    %25 = vector.broadcast %24 : vector<4x1xf32> to vector<4x8xf32>
    %26 = arith.subf %22, %25 : vector<4x8xf32>
    %27 = math.exp %26 : vector<4x8xf32>
    %cst_21 = arith.constant dense<0.000000e+00> : vector<4xf32>
    %28 = vector.multi_reduction <add>, %27, %cst_21 [1] : vector<4x8xf32> to vector<4xf32>
    %29 = vector.shape_cast %28 : vector<4xf32> to vector<4x1xf32>
    %30 = tpu.reciprocal %29 {approx = true} : vector<4x1xf32> -> vector<4x1xf32>
    %31 = arith.mulf %29, %30 : vector<4x1xf32>
    %cst_22 = arith.constant 2.000000e+00 : f32
    %32 = vector.broadcast %cst_22 : f32 to vector<4x1xf32>
    %33 = arith.subf %32, %31 : vector<4x1xf32>
    %34 = arith.mulf %30, %33 : vector<4x1xf32>
    %35 = vector.broadcast %34 : vector<4x1xf32> to vector<4x8xf32>
    %36 = arith.mulf %27, %35 : vector<4x8xf32>
    %c0_23 = arith.constant 0 : index
    %c0_24 = arith.constant 0 : index
    %37 = vector.load %arg8[%c0_23, %c0_24] : memref<4x8xf32, #tpu.memory_space<vmem>>, vector<4x8xf32>
    tpu.vector_store %arg8[%c0_23, %c0_24], %36 {strides = array<i32>} : memref<4x8xf32, #tpu.memory_space<vmem>>, vector<4x8xf32>,
    return
  }
}

</mosaic_0001>

<llo_original>
// kernel: attention_forward.1
$region0: #{attention_forward.1}
  #allocation0 [shape = 'u32[]', space=smem, size = 0x4, offset = 0x4, fixed_abs, tag = 'smem constant byte address 0x4 - core index']
  #allocation1 [shape = 'u32[144,128]{1,0:T(1,128)}', space=vmem, size = 0x12000, scoped, tag = 'internal scratch']
  %s0 = inlined_call_operand.vmem [shape: f32[4,32], index: 0, kind: input, shape index: {}]
  %s1 = inlined_call_operand.vmem [shape: f32[32,64], index: 1, kind: input, shape index: {}]
  %s2 = inlined_call_operand.vmem [shape: f32[96,32], index: 2, kind: input, shape index: {}]
  %s3 = inlined_call_operand.vmem [shape: f32[1,32], index: 3, kind: input, shape index: {}]
  %s4 = inlined_call_operand.vmem [shape: f32[1,32], index: 4, kind: input, shape index: {}]
  %s5 = inlined_call_operand.vmem [shape: f32[32,4], index: 5, kind: input, shape index: {}]
  %s6 = inlined_call_operand.vmem [shape: f32[4,32], index: 6, kind: input, shape index: {}]
  %s7 = inlined_call_operand.vmem [shape: f32[32,8], index: 7, kind: input, shape index: {}]
  %s8 = inlined_call_operand.hbm [shape: f32[4,8], index: 8, kind: output, shape index: {}]
  %s9 = sld [smem:[#allocation0]]
  $region42: #{attention_forward.1} parent=0
    _
  %s11 = ssub.s32 1, %s9
  %s12 = scalar_select 0, %s11, %s9
  $region1: #{attention_forward.1} parent=0
    #allocation2 [shape = 'u8[2048]{0}', space=vmem, size = 0x800, scoped, tag = 'output window, operand 0, single buffered']
    #allocation3 [shape = 's32[1]{0}', space=sflag, size = 0x4, scoped, tag = 'scoped memory for attention_forward.1']
    %13 = vsyncpa [#allocation3], 0
    // Predicated region
    $region2: #{attention_forward.1} parent=1 // pred_check
      _
    $region3: #{attention_forward.1} parent=1 // pred_check_branch
      %15 = sbr.rel (0) target = $region5
    $region4: #{attention_forward.1} parent=1 // pred_region
      _
    $region5: #{attention_forward.1} parent=1 // pred_fallthru
      _
    // Predicated region
    $region6: #{attention_forward.1} parent=1 // pred_check
      _
    $region7: #{attention_forward.1} parent=1 // pred_check_branch
      %17 = sbr.rel (0) target = $region9
    $region8: #{attention_forward.1} parent=1 // pred_region
      _
    $region9: #{attention_forward.1} parent=1 // pred_fallthru
      _
    // Predicated region
    $region10: #{attention_forward.1} parent=1 // pred_check
      _
    $region11: #{attention_forward.1} parent=1 // pred_check_branch
      %19 = sbr.rel (0) target = $region13
    $region12: #{attention_forward.1} parent=1 // pred_region
      _
    $region13: #{attention_forward.1} parent=1 // pred_fallthru
      _
    // Predicated region
    $region14: #{attention_forward.1} parent=1 // pred_check
      _
    $region15: #{attention_forward.1} parent=1 // pred_check_branch
      %21 = sbr.rel (0) target = $region17
    $region16: #{attention_forward.1} parent=1 // pred_region
      _
    $region17: #{attention_forward.1} parent=1 // pred_fallthru
      _
    // Predicated region
    $region18: #{attention_forward.1} parent=1 // pred_check
      _
    $region19: #{attention_forward.1} parent=1 // pred_check_branch
      %23 = sbr.rel (0) target = $region21
    $region20: #{attention_forward.1} parent=1 // pred_region
      _
    $region21: #{attention_forward.1} parent=1 // pred_fallthru
      _
    // Predicated region
    $region22: #{attention_forward.1} parent=1 // pred_check
      _
    $region23: #{attention_forward.1} parent=1 // pred_check_branch
      %25 = sbr.rel (0) target = $region25
    $region24: #{attention_forward.1} parent=1 // pred_region
      _
    $region25: #{attention_forward.1} parent=1 // pred_fallthru
      _
    // Predicated region
    $region26: #{attention_forward.1} parent=1 // pred_check
      _
    $region27: #{attention_forward.1} parent=1 // pred_check_branch
      %27 = sbr.rel (0) target = $region29
    $region28: #{attention_forward.1} parent=1 // pred_region
      _
    $region29: #{attention_forward.1} parent=1 // pred_fallthru
      _
    // Predicated region
    $region30: #{attention_forward.1} parent=1 // pred_check
      _
    $region31: #{attention_forward.1} parent=1 // pred_check_branch
      %29 = sbr.rel (0) target = $region33
    $region32: #{attention_forward.1} parent=1 // pred_region
      _
    $region33: #{attention_forward.1} parent=1 // pred_fallthru
      _
    %v30 = vld [vmem:[%s2] sm:$0xff]
    %v31 = vld [vmem:[%s2 + $0x8] sm:$0xff]
    %v32 = vld [vmem:[%s2 + $0x10] sm:$0xff]
    %v33 = vld [vmem:[%s2 + $0x18] sm:$0xff]
    %v34 = vld [vmem:[%s2 + $0x20] sm:$0xff]
    %v35 = vld [vmem:[%s2 + $0x28] sm:$0xff]
    %v36 = vld [vmem:[%s2 + $0x30] sm:$0xff]
    %v37 = vld [vmem:[%s2 + $0x38] sm:$0xff]
    %v38 = vld [vmem:[%s2 + $0x40] sm:$0xff]
    %v39 = vld [vmem:[%s2 + $0x48] sm:$0xff]
    %v40 = vld [vmem:[%s2 + $0x50] sm:$0xff]
    %v41 = vld [vmem:[%s2 + $0x58] sm:$0xff]
    %v42 = vld [vmem:[%s1] sm:$0xff]
    %v43 = vld [vmem:[%s1 + $0x8] sm:$0xff]
    %v44 = vld [vmem:[%s1 + $0x10] sm:$0xff]
    %v45 = vld [vmem:[%s1 + $0x18] sm:$0xff]
    %v46 = vld [vmem:[%s0] sm:$0xf]
    %v47 = vld [vmem:[%s3] sm:$0x1]
    %v49 = vlaneseq
    %v50 = vshrl.u32 %v49, 7
    %v51 = vsub.s32 0, %v50
    %v52 = vrot.slane %v47, %v51
    %vm54 = vcmask 261120
    %v56 = vsel %vm54, %v46, 0
    %58 = vmatprep.subr.mxu0 0.0
    %59 = vmatpush1.msra.mxu0 %v30
    %60 = vmatprep.subr.mxu0 0.0
    %61 = vmatpush1.msra.mxu0 %v31
    %62 = vmatprep.subr.mxu0 0.0
    %63 = vmatpush1.msra.mxu0 %v32
    %64 = vmatprep.subr.mxu0 0.0
    %65 = vmatpush1.msra.mxu0 %v33
    %66 = vmatprep.subr.mxu0 0.0
    %67 = vmatpush1.msra.mxu0 0.0
    %68 = vmatprep.subr.mxu0 0.0
    %69 = vmatpush1.msra.mxu0 0.0
    %70 = vmatprep.subr.mxu0 0.0
    %71 = vmatpush1.msra.mxu0 0.0
    %72 = vmatprep.subr.mxu0 0.0
    %73 = vmatpush1.msra.mxu0 0.0
    %74 = vmatprep.subr.mxu0 0.0
    %75 = vmatpush1.msra.mxu0 0.0
    %76 = vmatprep.subr.mxu0 0.0
    %77 = vmatpush1.msra.mxu0 0.0
    %78 = vmatprep.subr.mxu0 0.0
    %79 = vmatpush1.msra.mxu0 0.0
    %80 = vmatprep.subr.mxu0 0.0
    %81 = vmatpush1.msra.mxu0 0.0
    %82 = vmatprep.subr.mxu0 0.0
    %83 = vmatpush1.msra.mxu0 0.0
    %84 = vmatprep.subr.mxu0 0.0
    %85 = vmatpush1.msra.mxu0 0.0
    %86 = vmatprep.subr.mxu0 0.0
    %87 = vmatpush1.msra.mxu0 0.0
    %88 = vmatprep.subr.mxu0 0.0
    %89 = vmatpush1.msra.mxu0 0.0
    %90 = vmatprep.subr.mxu0 0.0
    %91 = vmatpush1.msra.mxu0 0.0
    %92 = vmatprep.subr.mxu0 0.0
    %93 = vmatpush1.msra.mxu0 0.0
    %94 = vmatprep.subr.mxu0 0.0
    %95 = vmatpush1.msra.mxu0 0.0
    %96 = vmatprep.subr.mxu0 0.0
    %97 = vmatpush1.msra.mxu0 0.0
    %98 = vmatprep.subr.mxu0 0.0
    %99 = vmatpush1.msra.mxu0 0.0
    %100 = vmatprep.subr.mxu0 0.0
    %101 = vmatpush1.msra.mxu0 0.0
    %102 = vmatprep.subr.mxu0 0.0
    %103 = vmatpush1.msra.mxu0 0.0
    %104 = vmatprep.subr.mxu0 0.0
    %105 = vmatpush1.msra.mxu0 0.0
    %106 = vmatprep.subr.mxu0 0.0
    %107 = vmatpush1.msra.mxu0 0.0
    %108 = vmatprep.subr.mxu0 0.0
    %109 = vmatpush1.msra.mxu0 0.0
    %110 = vmatprep.subr.mxu0 0.0
    %111 = vmatpush1.msra.mxu0 0.0
    %112 = vmatprep.subr.mxu0 0.0
    %113 = vmatpush1.msra.mxu0 0.0
    %114 = vmatprep.subr.mxu0 0.0
    %115 = vmatpush1.msra.mxu0 0.0
    %116 = vmatprep.subr.mxu0 0.0
    %117 = vmatpush1.msra.mxu0 0.0
    %118 = vmatprep.subr.mxu0 0.0
    %119 = vmatpush1.msra.mxu0 0.0
    %120 = vmatprep.subr.mxu0 0.0
    %121 = vmatpush1.msra.mxu0 0.0
    %122 = vmatprep.mubr.f32.mxu0 0.0
    %123 = vmatmul.mubr.f32.gmra.mrb[0].mxu0 %v56
    %v124 = vpop.f32.mrb[0].mxu0
    %v125 = vadd.f32 %v52, %v124
    %v126 = vpop.f32.mrb[0].mxu0
    %127 = vdwg.mxu0
    %v128 = vld [vmem:[%s5] sm:$0xff]
    %v129 = vld [vmem:[%s5 + $0x8] sm:$0xff]
    %v130 = vld [vmem:[%s5 + $0x10] sm:$0xff]
    %v131 = vld [vmem:[%s5 + $0x18] sm:$0xff]
    %vm132 = vcmask 31744
    %v134 = vsel %vm132, %v128, 0
    %v137 = vsel %vm132, %v129, 0
    %v140 = vsel %vm132, %v130, 0
    %v143 = vsel %vm132, %v131, 0
    %vm145 = vcmask 1043456
    %v147 = vsel %vm145, %v125, 0
    %149 = vmatprep.subr.mxu0 0.0
    %150 = vmatpush1.msra.mxu0 %v147
    %151 = vmatprep.subr.mxu0 0.0
    %152 = vmatpush1.msra.mxu0 0.0
    %153 = vmatprep.subr.mxu0 0.0
    %154 = vmatpush1.msra.mxu0 0.0
    %155 = vmatprep.subr.mxu0 0.0
    %156 = vmatpush1.msra.mxu0 0.0
    %157 = vmatprep.subr.mxu0 0.0
    %158 = vmatpush1.msra.mxu0 0.0
    %159 = vmatprep.subr.mxu0 0.0
    %160 = vmatpush1.msra.mxu0 0.0
    %161 = vmatprep.subr.mxu0 0.0
    %162 = vmatpush1.msra.mxu0 0.0
    %163 = vmatprep.subr.mxu0 0.0
    %164 = vmatpush1.msra.mxu0 0.0
    %165 = vmatprep.subr.mxu0 0.0
    %166 = vmatpush1.msra.mxu0 0.0
    %167 = vmatprep.subr.mxu0 0.0
    %168 = vmatpush1.msra.mxu0 0.0
    %169 = vmatprep.subr.mxu0 0.0
    %170 = vmatpush1.msra.mxu0 0.0
    %171 = vmatprep.subr.mxu0 0.0
    %172 = vmatpush1.msra.mxu0 0.0
    %173 = vmatprep.subr.mxu0 0.0
    %174 = vmatpush1.msra.mxu0 0.0
    %175 = vmatprep.subr.mxu0 0.0
    %176 = vmatpush1.msra.mxu0 0.0
    %177 = vmatprep.subr.mxu0 0.0
    %178 = vmatpush1.msra.mxu0 0.0
    %179 = vmatprep.subr.mxu0 0.0
    %180 = vmatpush1.msra.mxu0 0.0
    %181 = vmatprep.subr.mxu0 0.0
    %182 = vmatpush1.msra.mxu0 0.0
    %183 = vmatprep.subr.mxu0 0.0
    %184 = vmatpush1.msra.mxu0 0.0
    %185 = vmatprep.subr.mxu0 0.0
    %186 = vmatpush1.msra.mxu0 0.0
    %187 = vmatprep.subr.mxu0 0.0
    %188 = vmatpush1.msra.mxu0 0.0
    %189 = vmatprep.subr.mxu0 0.0
    %190 = vmatpush1.msra.mxu0 0.0
    %191 = vmatprep.subr.mxu0 0.0
    %192 = vmatpush1.msra.mxu0 0.0
    %193 = vmatprep.subr.mxu0 0.0
    %194 = vmatpush1.msra.mxu0 0.0
    %195 = vmatprep.subr.mxu0 0.0
    %196 = vmatpush1.msra.mxu0 0.0
    %197 = vmatprep.subr.mxu0 0.0
    %198 = vmatpush1.msra.mxu0 0.0
    %199 = vmatprep.subr.mxu0 0.0
    %200 = vmatpush1.msra.mxu0 0.0
    %201 = vmatprep.subr.mxu0 0.0
    %202 = vmatpush1.msra.mxu0 0.0
    %203 = vmatprep.subr.mxu0 0.0
    %204 = vmatpush1.msra.mxu0 0.0
    %205 = vmatprep.subr.mxu0 0.0
    %206 = vmatpush1.msra.mxu0 0.0
    %207 = vmatprep.subr.mxu0 0.0
    %208 = vmatpush1.msra.mxu0 0.0
    %209 = vmatprep.subr.mxu0 0.0
    %210 = vmatpush1.msra.mxu0 0.0
    %211 = vmatprep.subr.mxu0 0.0
    %212 = vmatpush1.msra.mxu0 0.0
    %213 = vmatprep.mubr.f32.mxu0 0.0
    %214 = vmatmul.mubr.f32.gmra.mrb[0].mxu0 %v134
    %v215 = vpop.f32.mrb[0].mxu0
    %v216 = vadd.f32 0.0, %v215
    %v217 = vpop.f32.mrb[0].mxu0
    %218 = vmatprep.mubr.f32.mxu0 0.0
    %219 = vmatmul.mubr.f32.gmra.mrb[0].mxu0 %v137
    %v220 = vpop.f32.mrb[0].mxu0
    %v221 = vadd.f32 0.0, %v220
    %v222 = vpop.f32.mrb[0].mxu0
    %223 = vmatprep.mubr.f32.mxu0 0.0
    %224 = vmatmul.mubr.f32.gmra.mrb[0].mxu0 %v140
    %v225 = vpop.f32.mrb[0].mxu0
    %v226 = vadd.f32 0.0, %v225
    %v227 = vpop.f32.mrb[0].mxu0
    %228 = vmatprep.mubr.f32.mxu0 0.0
    %229 = vmatmul.mubr.f32.gmra.mrb[0].mxu0 %v143
    %v230 = vpop.f32.mrb[0].mxu0
    %v231 = vadd.f32 0.0, %v230
    %v232 = vpop.f32.mrb[0].mxu0
    %233 = vdwg.mxu0
    %vm234 = vcmask 523264
    %v236 = vsel %vm234, %v42, 0
    %v239 = vsel %vm234, %v43, 0
    %v242 = vsel %vm234, %v44, 0
    %v245 = vsel %vm234, %v45, 0
    %247 = vmatprep.subr.mxu0 0.0
    %248 = vmatpush1.msra.mxu0 %v34
    %249 = vmatprep.subr.mxu0 0.0
    %250 = vmatpush1.msra.mxu0 %v35
    %251 = vmatprep.subr.mxu0 0.0
    %252 = vmatpush1.msra.mxu0 %v36
    %253 = vmatprep.subr.mxu0 0.0
    %254 = vmatpush1.msra.mxu0 %v37
    %255 = vmatprep.subr.mxu0 0.0
    %256 = vmatpush1.msra.mxu0 %v38
    %257 = vmatprep.subr.mxu0 0.0
    %258 = vmatpush1.msra.mxu0 %v39
    %259 = vmatprep.subr.mxu0 0.0
    %260 = vmatpush1.msra.mxu0 %v40
    %261 = vmatprep.subr.mxu0 0.0
    %262 = vmatpush1.msra.mxu0 %v41
    %263 = vmatprep.subr.mxu0 0.0
    %264 = vmatpush1.msra.mxu0 0.0
    %265 = vmatprep.subr.mxu0 0.0
    %266 = vmatpush1.msra.mxu0 0.0
    %267 = vmatprep.subr.mxu0 0.0
    %268 = vmatpush1.msra.mxu0 0.0
    %269 = vmatprep.subr.mxu0 0.0
    %270 = vmatpush1.msra.mxu0 0.0
    %271 = vmatprep.subr.mxu0 0.0
    %272 = vmatpush1.msra.mxu0 0.0
    %273 = vmatprep.subr.mxu0 0.0
    %274 = vmatpush1.msra.mxu0 0.0
    %275 = vmatprep.subr.mxu0 0.0
    %276 = vmatpush1.msra.mxu0 0.0
    %277 = vmatprep.subr.mxu0 0.0
    %278 = vmatpush1.msra.mxu0 0.0
    %279 = vmatprep.subr.mxu0 0.0
    %280 = vmatpush1.msra.mxu0 0.0
    %281 = vmatprep.subr.mxu0 0.0
    %282 = vmatpush1.msra.mxu0 0.0
    %283 = vmatprep.subr.mxu0 0.0
    %284 = vmatpush1.msra.mxu0 0.0
    %285 = vmatprep.subr.mxu0 0.0
    %286 = vmatpush1.msra.mxu0 0.0
    %287 = vmatprep.subr.mxu0 0.0
    %288 = vmatpush1.msra.mxu0 0.0
    %289 = vmatprep.subr.mxu0 0.0
    %290 = vmatpush1.msra.mxu0 0.0
    %291 = vmatprep.subr.mxu0 0.0
    %292 = vmatpush1.msra.mxu0 0.0
    %293 = vmatprep.subr.mxu0 0.0
    %294 = vmatpush1.msra.mxu0 0.0
    %295 = vmatprep.subr.mxu0 0.0
    %296 = vmatpush1.msra.mxu0 0.0
    %297 = vmatprep.subr.mxu0 0.0
    %298 = vmatpush1.msra.mxu0 0.0
    %299 = vmatprep.subr.mxu0 0.0
    %300 = vmatpush1.msra.mxu0 0.0
    %301 = vmatprep.subr.mxu0 0.0
    %302 = vmatpush1.msra.mxu0 0.0
    %303 = vmatprep.subr.mxu0 0.0
    %304 = vmatpush1.msra.mxu0 0.0
    %305 = vmatprep.subr.mxu0 0.0
    %306 = vmatpush1.msra.mxu0 0.0
    %307 = vmatprep.subr.mxu0 0.0
    %308 = vmatpush1.msra.mxu0 0.0
    %309 = vmatprep.subr.mxu0 0.0
    %310 = vmatpush1.msra.mxu0 0.0
    %311 = vmatprep.mubr.f32.mxu0 0.0
    %312 = vmatmul.mubr.f32.gmra.mrb[0].mxu0 %v236
    %v313 = vpop.f32.mrb[0].mxu0
    %v314 = vadd.f32 %v216, %v313
    %v315 = vpop.f32.mrb[0].mxu0
    %316 = vmatprep.mubr.f32.mxu0 0.0
    %317 = vmatmul.mubr.f32.gmra.mrb[0].mxu0 %v239
    %v318 = vpop.f32.mrb[0].mxu0
    %v319 = vadd.f32 %v221, %v318
    %v320 = vpop.f32.mrb[0].mxu0
    %321 = vmatprep.mubr.f32.mxu0 0.0
    %322 = vmatmul.mubr.f32.gmra.mrb[0].mxu0 %v242
    %v323 = vpop.f32.mrb[0].mxu0
    %v324 = vadd.f32 %v226, %v323
    %v325 = vpop.f32.mrb[0].mxu0
    %326 = vmatprep.mubr.f32.mxu0 0.0
    %327 = vmatmul.mubr.f32.gmra.mrb[0].mxu0 %v245
    %v328 = vpop.f32.mrb[0].mxu0
    %v329 = vadd.f32 %v231, %v328
    %v330 = vpop.f32.mrb[0].mxu0
    %331 = vdwg.mxu0
    %v332 = vtanh.pop %v314
    %v333 = vtanh.pop %v319
    %v334 = vtanh.pop %v324
    %v335 = vtanh.pop %v329
    %v336 = vld [vmem:[%s4] sm:$0x1]
    %v338 = vlaneseq
    %v339 = vshrl.u32 %v338, 7
    %v340 = vsub.s32 0, %v339
    %v341 = vrot.slane %v336, %v340
    %v343 = vmul.f32 %v332, %v341
    %v344 = vmul.f32 %v333, %v341
    %v345 = vmul.f32 %v334, %v341
    %v346 = vmul.f32 %v335, %v341
    %v347 = vsel %vm54, %v343, 0.0
    %348 = vadd.xlane.f32.xlu0 %v347
    %v349 = vpop.xlane.xlu0 %348
    %v350 = vsel %vm54, %v344, 0.0
    %351 = vadd.xlane.f32.xlu0 %v350
    %v352 = vpop.xlane.xlu0 %351
    %v353 = vsel %vm54, %v345, 0.0
    %354 = vadd.xlane.f32.xlu0 %v353
    %v355 = vpop.xlane.xlu0 %354
    %v356 = vsel %vm54, %v346, 0.0
    %357 = vadd.xlane.f32.xlu0 %v356
    %v358 = vpop.xlane.xlu0 %357
    %v359 = vld [vmem:[%s6] sm:$0xf]
    %v360 = vld [vmem:[%s7] sm:$0xff]
    %v361 = vld [vmem:[%s7 + $0x8] sm:$0xff]
    %v362 = vld [vmem:[%s7 + $0x10] sm:$0xff]
    %v363 = vld [vmem:[%s7 + $0x18] sm:$0xff]
    %v364 = vmul.f32 %v349, %v360
    %v365 = vmul.f32 %v352, %v361
    %v366 = vmul.f32 %v355, %v362
    %v367 = vmul.f32 %v358, %v363
    %v369 = vsel %vm54, %v359, 0
    %371 = vmatprep.subr.mxu0 0.0
    %372 = vmatpush1.msra.mxu0 %v364
    %373 = vmatprep.subr.mxu0 0.0
    %374 = vmatpush1.msra.mxu0 %v365
    %375 = vmatprep.subr.mxu0 0.0
    %376 = vmatpush1.msra.mxu0 %v366
    %377 = vmatprep.subr.mxu0 0.0
    %378 = vmatpush1.msra.mxu0 %v367
    %379 = vmatprep.subr.mxu0 0.0
    %380 = vmatpush1.msra.mxu0 0.0
    %381 = vmatprep.subr.mxu0 0.0
    %382 = vmatpush1.msra.mxu0 0.0
    %383 = vmatprep.subr.mxu0 0.0
    %384 = vmatpush1.msra.mxu0 0.0
    %385 = vmatprep.subr.mxu0 0.0
    %386 = vmatpush1.msra.mxu0 0.0
    %387 = vmatprep.subr.mxu0 0.0
    %388 = vmatpush1.msra.mxu0 0.0
    %389 = vmatprep.subr.mxu0 0.0
    %390 = vmatpush1.msra.mxu0 0.0
    %391 = vmatprep.subr.mxu0 0.0
    %392 = vmatpush1.msra.mxu0 0.0
    %393 = vmatprep.subr.mxu0 0.0
    %394 = vmatpush1.msra.mxu0 0.0
    %395 = vmatprep.subr.mxu0 0.0
    %396 = vmatpush1.msra.mxu0 0.0
    %397 = vmatprep.subr.mxu0 0.0
    %398 = vmatpush1.msra.mxu0 0.0
    %399 = vmatprep.subr.mxu0 0.0
    %400 = vmatpush1.msra.mxu0 0.0
    %401 = vmatprep.subr.mxu0 0.0
    %402 = vmatpush1.msra.mxu0 0.0
    %403 = vmatprep.subr.mxu0 0.0
    %404 = vmatpush1.msra.mxu0 0.0
    %405 = vmatprep.subr.mxu0 0.0
    %406 = vmatpush1.msra.mxu0 0.0
    %407 = vmatprep.subr.mxu0 0.0
    %408 = vmatpush1.msra.mxu0 0.0
    %409 = vmatprep.subr.mxu0 0.0
    %410 = vmatpush1.msra.mxu0 0.0
    %411 = vmatprep.subr.mxu0 0.0
    %412 = vmatpush1.msra.mxu0 0.0
    %413 = vmatprep.subr.mxu0 0.0
    %414 = vmatpush1.msra.mxu0 0.0
    %415 = vmatprep.subr.mxu0 0.0
    %416 = vmatpush1.msra.mxu0 0.0
    %417 = vmatprep.subr.mxu0 0.0
    %418 = vmatpush1.msra.mxu0 0.0
    %419 = vmatprep.subr.mxu0 0.0
    %420 = vmatpush1.msra.mxu0 0.0
    %421 = vmatprep.subr.mxu0 0.0
    %422 = vmatpush1.msra.mxu0 0.0
    %423 = vmatprep.subr.mxu0 0.0
    %424 = vmatpush1.msra.mxu0 0.0
    %425 = vmatprep.subr.mxu0 0.0
    %426 = vmatpush1.msra.mxu0 0.0
    %427 = vmatprep.subr.mxu0 0.0
    %428 = vmatpush1.msra.mxu0 0.0
    %429 = vmatprep.subr.mxu0 0.0
    %430 = vmatpush1.msra.mxu0 0.0
    %431 = vmatprep.subr.mxu0 0.0
    %432 = vmatpush1.msra.mxu0 0.0
    %433 = vmatprep.subr.mxu0 0.0
    %434 = vmatpush1.msra.mxu0 0.0
    %435 = vmatprep.mubr.f32.mxu0 0.0
    %436 = vmatmul.mubr.f32.gmra.mrb[0].mxu0 %v369
    %v437 = vpop.f32.mrb[0].mxu0
    %v438 = vadd.f32 0.0, %v437
    %v439 = vpop.f32.mrb[0].mxu0
    %440 = vdwg.mxu0
    %vm441 = vcmask 60416
    %v442 = vsel %vm441, %v438, -inf
    %443 = vmax.xlane.f32.xlu0 %v442
    %v444 = vpop.xlane.xlu0 %443
    %v445 = vsub.f32 %v438, %v444
    %v446 = vmul.f32 %v445, 1.442695
    %v447 = vpow.pop %v446
    %v448 = vsel %vm441, %v447, 0.0
    %449 = vadd.xlane.f32.xlu0 %v448
    %v450 = vpop.xlane.xlu0 %449
    %v451 = vrcp.pop %v450
    %v452 = vmul.f32 %v450, %v451
    %v453 = vsub.f32 2.0, %v452
    %v454 = vmul.f32 %v451, %v453
    %v455 = vmul.f32 %v447, %v454
    %456 = vst.msk [vmem:[#allocation2] sm:$0xf] %vm441, %v455
    // Predicated region
    $region34: #{attention_forward.1} parent=1 // pred_check
      _
    $region35: #{attention_forward.1} parent=1 // pred_check_branch
      %458 = sbr.rel (0) target = $region37
    $region36: #{attention_forward.1} parent=1 // pred_region
      %s460 = ssub.s32 64, 64
      %461 = vsyncadd [#allocation3], %s460
      %s463 = sshll.u32 [#allocation2], 4
      %s464 = int_to_ptr.vmem [resolvable:$true] %s463
      %466 = dma.vmem_to_hbm [thread:$0]  %s464, 64, %s8, [#allocation3]
    $region37: #{attention_forward.1} parent=1 // pred_fallthru
      _
    // Predicated region
    $region38: #{attention_forward.1} parent=1 // pred_check
      _
    $region39: #{attention_forward.1} parent=1 // pred_check_branch
      %468 = sbr.rel (0) target = $region41
    $region40: #{attention_forward.1} parent=1 // pred_region
      %469 = dma.done [#allocation3], 64
    $region41: #{attention_forward.1} parent=1 // pred_fallthru
      _
    %470 = vsyncpa [#allocation3], 1

</llo_original>
